<compile_context>
chip_gen: v5e
topology: v5e:2x2
jax: 0.10.0
libtpu: 0.0.40
codegen_flags: <defaults>
</compile_context>

<pallas_src>
import functools
import math

import jax
import jax.numpy as jnp
from jax.experimental import pallas as pl
from jax.experimental.pallas import tpu as pltpu


# ----------------------------------------------------------------------------
# helpers
# ----------------------------------------------------------------------------
def _tile(dim, target, align):
    """Largest block size <= target that divides `dim` and is `align`-aligned.

    Falls back to the full dimension (always a legal block) only when no aligned
    divisor exists.
    """
    t = min(dim, target)
    if t == dim:
        return dim
    if dim % t == 0 and t % align == 0:
        return t
    d = (t // align) * align
    while d >= align:
        if dim % d == 0:
            return d
        d -= align
    return dim


@functools.lru_cache(maxsize=None)
def _vmem_budget_bytes():
    """Per-core VMEM budget: 75% of physical capacity (headroom for Mosaic scratch)."""
    cap = 64 << 20  # conservative fallback = v7x per-TC VMEM
    try:
        info = pltpu.get_tpu_info()
        cap = int(getattr(info, "vmem_capacity_bytes", cap) or cap)
    except Exception:
        pass
    return int(cap * 3 // 4)


def _ln_math(x, g, b, eps):
    mu = jnp.mean(x, axis=-1, keepdims=True)
    var = jnp.mean(jnp.square(x - mu), axis=-1, keepdims=True)
    return (x - mu) * jax.lax.rsqrt(var + eps) * g + b


# ----------------------------------------------------------------------------
# linear (x @ W + b, optional fused GELU): full-K single-shot or K-tiled
# ----------------------------------------------------------------------------
def _linear_kernel(x_ref, w_ref, b_ref, o_ref, *, act):
    # single-shot full-K contraction: no accumulator scratch, no init/finalize
    y = jnp.dot(x_ref[...], w_ref[...], preferred_element_type=jnp.float32)
    y = y + b_ref[...].astype(jnp.float32)
    if act == "gelu":
        # TODO(synk): reference BERT uses exact erf GELU; tanh approximation used
        # here (guaranteed Mosaic lowering).
        y = jax.nn.gelu(y, approximate=True)
    o_ref[...] = y.astype(o_ref.dtype)


def _linear_acc_kernel(x_ref, w_ref, b_ref, o_ref, acc_ref, *, act):
    @pl.when(pl.program_id(2) == 0)
    def _():
        acc_ref[...] = jnp.zeros_like(acc_ref)

    acc_ref[...] += jnp.dot(x_ref[...], w_ref[...],
                            preferred_element_type=jnp.float32)

    @pl.when(pl.program_id(2) == pl.num_programs(2) - 1)
    def _():
        y = acc_ref[...] + b_ref[...].astype(jnp.float32)
        if act == "gelu":
            y = jax.nn.gelu(y, approximate=True)
        o_ref[...] = y.astype(o_ref.dtype)


def linear(x2d, w, b, act=None, *, tm=512, tn=512, tk=None):
    """x2d: (M, K) @ w: (K, N) + b: (N,) -> (M, N)."""
    M, K = x2d.shape
    N = w.shape[1]
    itemsize = x2d.dtype.itemsize
    budget = _vmem_budget_bytes()
    bm = _tile(M, tm, 8)
    bn = _tile(N, tn, 128)

    if tk is None:
        full_k_bytes = 2 * (bm * K + K * bn + bm * bn) * itemsize
        bk = K if full_k_bytes <= budget else _tile(K, 1024, 128)
    else:
        bk = _tile(K, tk, 128)

    if bk == K:  # full-reduction path: no k grid axis, no accumulator
        blk_bytes = 2 * (bm * K + K * bn + bm * bn) * itemsize
        vmem_limit = int(min(max(2 * blk_bytes, 32 << 20), budget))
        return pl.pallas_call(
            functools.partial(_linear_kernel, act=act),
            out_shape=jax.ShapeDtypeStruct((M, N), x2d.dtype),
            grid=(M // bm, N // bn),
            in_specs=[
                pl.BlockSpec((bm, K), lambda i, j: (i, 0)),
                pl.BlockSpec((K, bn), lambda i, j: (0, j)),
                pl.BlockSpec((1, bn), lambda i, j: (0, j)),
            ],
            out_specs=pl.BlockSpec((bm, bn), lambda i, j: (i, j)),
            compiler_params=pltpu.CompilerParams(
                dimension_semantics=("parallel", "parallel"),
                vmem_limit_bytes=vmem_limit),
        )(x2d, w, b.reshape(1, N))

    # K-tiled reduction path (f32 VMEM accumulator, init/finalize via pl.when)
    blk_bytes = 2 * (bm * bk + bk * bn + bm * bn) * itemsize + bm * bn * 4
    vmem_limit = int(min(max(2 * blk_bytes, 32 << 20), budget))
    return pl.pallas_call(
        functools.partial(_linear_acc_kernel, act=act),
        out_shape=jax.ShapeDtypeStruct((M, N), x2d.dtype),
        grid=(M // bm, N // bn, K // bk),
        in_specs=[
            pl.BlockSpec((bm, bk), lambda i, j, k: (i, k)),
            pl.BlockSpec((bk, bn), lambda i, j, k: (k, j)),
            pl.BlockSpec((1, bn), lambda i, j, k: (0, j)),
        ],
        out_specs=pl.BlockSpec((bm, bn), lambda i, j, k: (i, j)),
        scratch_shapes=[pltpu.VMEM((bm, bn), jnp.float32)],
        compiler_params=pltpu.CompilerParams(
            dimension_semantics=("parallel", "parallel", "arbitrary"),
            vmem_limit_bytes=vmem_limit),
    )(x2d, w, b.reshape(1, N))


# ----------------------------------------------------------------------------
# fused QKV projection: one (K, 3H) matmul writing three separate (M, H) outputs
# ----------------------------------------------------------------------------
def _qkv_kernel(x_ref, w_ref, b_ref, q_ref, k_ref, v_ref, *, hidden):
    H = hidden
    y = jnp.dot(x_ref[...], w_ref[...], preferred_element_type=jnp.float32)
    y = y + b_ref[...].astype(jnp.float32)
    q_ref[...] = y[:, 0 * H:1 * H].astype(q_ref.dtype)
    k_ref[...] = y[:, 1 * H:2 * H].astype(k_ref.dtype)
    v_ref[...] = y[:, 2 * H:3 * H].astype(v_ref.dtype)


def qkv_linear(x2d, w, b, *, hidden, tm=512):
    """x2d: (M, K) @ w: (K, 3H) + b -> (q, k, v) each (M, H); no XLA slice pass."""
    M, K = x2d.shape
    H = hidden
    itemsize = x2d.dtype.itemsize
    budget = _vmem_budget_bytes()
    bm = _tile(M, tm, 8)
    blk_bytes = 2 * (bm * K + K * 3 * H + 3 * bm * H) * itemsize + bm * 3 * H * 4
    vmem_limit = int(min(max(2 * blk_bytes, 32 << 20), budget))
    out_sds = jax.ShapeDtypeStruct((M, H), x2d.dtype)
    out_spec = pl.BlockSpec((bm, H), lambda i: (i, 0))
    return pl.pallas_call(
        functools.partial(_qkv_kernel, hidden=H),
        out_shape=(out_sds, out_sds, out_sds),
        grid=(M // bm,),
        in_specs=[
            pl.BlockSpec((bm, K), lambda i: (i, 0)),
            pl.BlockSpec((K, 3 * H), lambda i: (0, 0)),
            pl.BlockSpec((1, 3 * H), lambda i: (0, 0)),
        ],
        out_specs=(out_spec, out_spec, out_spec),
        compiler_params=pltpu.CompilerParams(
            dimension_semantics=("parallel",),
            vmem_limit_bytes=vmem_limit),
    )(x2d, w, b.reshape(1, 3 * H))


# ----------------------------------------------------------------------------
# fused linear + residual-add + LayerNorm (full-K, full row in one N tile)
# ----------------------------------------------------------------------------
def _linear_add_ln_kernel(x_ref, w_ref, b_ref, r_ref, g_ref, bt_ref, o_ref, *, eps):
    y = jnp.dot(x_ref[...], w_ref[...], preferred_element_type=jnp.float32)
    y = y + b_ref[...].astype(jnp.float32) + r_ref[...].astype(jnp.float32)
    o_ref[...] = _ln_math(y, g_ref[...].astype(jnp.float32),
                          bt_ref[...].astype(jnp.float32), eps).astype(o_ref.dtype)


def linear_add_ln(x2d, w, b, residual, gamma, beta, *, eps=1e-12, tm=512):
    """LayerNorm(x2d @ w + b + residual); saves a full (M, H) HBM round-trip."""
    M, K = x2d.shape
    N = w.shape[1]
    itemsize = x2d.dtype.itemsize
    budget = _vmem_budget_bytes()
    bm = _tile(M, tm, 8)
    # TODO(synk): if K*N weight tile ever exceeds the VMEM budget, fall back to
    # linear() + layernorm(); fine for BERT-sized shapes.
    blk_bytes = 2 * (bm * K + K * N + 2 * bm * N) * itemsize
    vmem_limit = int(min(max(2 * blk_bytes, 32 << 20), budget))
    return pl.pallas_call(
        functools.partial(_linear_add_ln_kernel, eps=eps),
        out_shape=jax.ShapeDtypeStruct((M, N), x2d.dtype),
        grid=(M // bm,),
        in_specs=[
            pl.BlockSpec((bm, K), lambda i: (i, 0)),
            pl.BlockSpec((K, N), lambda i: (0, 0)),
            pl.BlockSpec((1, N), lambda i: (0, 0)),
            pl.BlockSpec((bm, N), lambda i: (i, 0)),
            pl.BlockSpec((1, N), lambda i: (0, 0)),
            pl.BlockSpec((1, N), lambda i: (0, 0)),
        ],
        out_specs=pl.BlockSpec((bm, N), lambda i: (i, 0)),
        compiler_params=pltpu.CompilerParams(
            dimension_semantics=("parallel",),
            vmem_limit_bytes=vmem_limit),
    )(x2d, w, b.reshape(1, N), residual, gamma.reshape(1, N), beta.reshape(1, N))


# ----------------------------------------------------------------------------
# standalone LayerNorm (embeddings only), row-tiled
# ----------------------------------------------------------------------------
def _layernorm_kernel(x_ref, g_ref, b_ref, o_ref, *, eps):
    x = x_ref[...].astype(jnp.float32)
    o_ref[...] = _ln_math(x, g_ref[...].astype(jnp.float32),
                          b_ref[...].astype(jnp.float32), eps).astype(o_ref.dtype)


def layernorm(x2d, gamma, beta, *, eps=1e-12, tm=1024, out_dtype=None):
    M, H = x2d.shape
    out_dtype = out_dtype or x2d.dtype
    bm = _tile(M, tm, 8)
    row_spec = pl.BlockSpec((bm, H), lambda i: (i, 0))
    vec_spec = pl.BlockSpec((1, H), lambda i: (0, 0))
    return pl.pallas_call(
        functools.partial(_layernorm_kernel, eps=eps),
        out_shape=jax.ShapeDtypeStruct((M, H), out_dtype),
        grid=(M // bm,),
        in_specs=[row_spec, vec_spec, vec_spec],
        out_specs=row_spec,
        compiler_params=pltpu.CompilerParams(dimension_semantics=("parallel",)),
    )(x2d, gamma.reshape(1, H), beta.reshape(1, H))


# ----------------------------------------------------------------------------
# self-attention: lane-dense [B, S, H] layout, batched heads, q-tiled grid
# ----------------------------------------------------------------------------
def _attention_kernel(q_ref, k_ref, v_ref, m_ref, o_ref, *, n_heads, d_head, scale):
    tq = q_ref.shape[1]
    S = k_ref.shape[1]
    H = n_heads * d_head
    # fold softmax scale into q once (saves n_heads * S * S VPU multiplies)
    q = q_ref[0] * jnp.asarray(scale, dtype=q_ref.dtype)          # (tq, H)
    k = k_ref[0]                                                   # (S,  H)
    v = v_ref[0]                                                   # (S,  H)
    mask = m_ref[0].astype(jnp.float32)                           # (1,  S)
    # batched-head view (heads, seq, d_head): bounded live ranges, MXU-packable
    qh = jnp.swapaxes(q.reshape(tq, n_heads, d_head), 0, 1)       # (h, tq, d)
    kh = jnp.swapaxes(k.reshape(S, n_heads, d_head), 0, 1)        # (h, S,  d)
    vh = jnp.swapaxes(v.reshape(S, n_heads, d_head), 0, 1)        # (h, S,  d)
    s = jnp.einsum('hqd,hkd->hqk', qh, kh,
                   preferred_element_type=jnp.float32)            # (h, tq, S) f32
    s = s + mask[:, None, :]
    s = s - jnp.max(s, axis=-1, keepdims=True)
    p = jnp.exp(s)
    p = p * pl.reciprocal(jnp.sum(p, axis=-1, keepdims=True), approx=True)
    ctx = jnp.einsum('hqk,hkd->hqd', p.astype(v.dtype), vh,
                     preferred_element_type=jnp.float32)          # (h, tq, d) f32
    # single lane-dense (tq, H) store
    o_ref[0] = jnp.swapaxes(ctx, 0, 1).reshape(tq, H).astype(o_ref.dtype)


def attention(q, k, v, ext_mask, *, n_heads, tq=256):
    """q/k/v: (B, S, H); ext_mask: (B, 1, S) additive f32. Returns (B, S, H)."""
    # TODO(synk): for long sequences, tile K/V along seq with an online-softmax
    # (flash-style) accumulator instead of the full (heads, tq, S) score block.
    B, S, H = q.shape
    d_head = H // n_heads
    scale = 1.0 / math.sqrt(d_head)
    bq = _tile(S, tq, 8)
    q_spec = pl.BlockSpec((1, bq, H), lambda b, qi: (b, qi, 0))
    kv_spec = pl.BlockSpec((1, S, H), lambda b, qi: (b, 0, 0))
    return pl.pallas_call(
        functools.partial(_attention_kernel, n_heads=n_heads,
                          d_head=d_head, scale=scale),
        out_shape=jax.ShapeDtypeStruct((B, S, H), q.dtype),
        grid=(B, S // bq),
        in_specs=[q_spec, kv_spec, kv_spec,
                  pl.BlockSpec((1, 1, S), lambda b, qi: (b, 0, 0))],
        out_specs=q_spec,
        compiler_params=pltpu.CompilerParams(
            dimension_semantics=("parallel", "parallel"),
            vmem_limit_bytes=_vmem_budget_bytes()),
    )(q, k, v, ext_mask)


# ----------------------------------------------------------------------------
# fused mean/max pool + dense + final_dense + sigmoid, tiled over batch
# ----------------------------------------------------------------------------
def _pool_head_kernel(x_ref, w1_ref, b1_ref, w2_ref, b2_ref, o_ref):
    x = x_ref[...].astype(jnp.float32)               # (tb, S, H)
    avg_pooled = jnp.mean(x, axis=1)                 # (tb, H)
    max_pooled = jnp.max(x, axis=1)                  # (tb, H)  (pads included, as in torch ref)
    pooled = jnp.concatenate([avg_pooled, max_pooled], axis=1)   # (tb, 2H)
    pooled = jnp.dot(pooled, w1_ref[...].astype(jnp.float32),
                     preferred_element_type=jnp.float32) + b1_ref[...].astype(jnp.float32)
    pred = jnp.dot(pooled, w2_ref[...].astype(jnp.float32),
                   preferred_element_type=jnp.float32) + b2_ref[...].astype(jnp.float32)
    o_ref[...] = jax.nn.sigmoid(pred).astype(o_ref.dtype)


def pool_head(seq_out, w1, b1, w2, b2, *, tb=8):
    B, S, H = seq_out.shape
    bb = _tile(B, tb, 8)
    return pl.pallas_call(
        _pool_head_kernel,
        out_shape=jax.ShapeDtypeStruct((B, 1), jnp.float32),
        grid=(B // bb,),
        in_specs=[
            pl.BlockSpec((bb, S, H), lambda i: (i, 0, 0)),
            pl.BlockSpec((2 * H, H), lambda i: (0, 0)),
            pl.BlockSpec((1, H), lambda i: (0, 0)),
            pl.BlockSpec((H, 1), lambda i: (0, 0)),
            pl.BlockSpec((1, 1), lambda i: (0, 0)),
        ],
        out_specs=pl.BlockSpec((bb, 1), lambda i: (i, 0)),
        compiler_params=pltpu.CompilerParams(dimension_semantics=("parallel",)),
    )(seq_out, w1, b1.reshape(1, H), w2, b2.reshape(1, 1))


# ----------------------------------------------------------------------------
# parameters (fused QKV weight = concat of PyTorch q/k/v weights, transposed)
# matmul weights in bf16 (compute dtype); biases, LN params, embeddings in f32
# ----------------------------------------------------------------------------
def init_params(key, *, vocab, max_pos, type_vocab, hidden, heads, n_layers, inter,
                param_dtype=jnp.bfloat16):
    def nrm(k, shape, dtype=param_dtype):
        return (0.02 * jax.random.normal(k, shape, jnp.float32)).astype(dtype)

    keys = iter(jax.random.split(key, 8 + 6 * n_layers))
    params = {
        "cfg": dict(hidden=hidden, heads=heads, n_layers=n_layers, inter=inter),
        "dtype": param_dtype,
        "word_emb": nrm(next(keys), (vocab, hidden), jnp.float32),
        "pos_emb": nrm(next(keys), (max_pos, hidden), jnp.float32),
        "tok_emb": nrm(next(keys), (type_vocab, hidden), jnp.float32),
        "emb_ln_g": jnp.ones((hidden,), jnp.float32),
        "emb_ln_b": jnp.zeros((hidden,), jnp.float32),
        # pooling / classification head
        "dense_w": nrm(next(keys), (2 * hidden, hidden)),
        "dense_b": jnp.zeros((hidden,), jnp.float32),
        "final_w": nrm(next(keys), (hidden, 1)),
        "final_b": jnp.zeros((1,), jnp.float32),
        "layers": [],
    }
    for _ in range(n_layers):
        q_w = nrm(next(keys), (hidden, hidden))
        k_w = nrm(next(keys), (hidden, hidden))
        v_w = nrm(next(keys), (hidden, hidden))
        layer = {
            "qkv_w": jnp.concatenate([q_w, k_w, v_w], axis=1),          # (H, 3H)
            "qkv_b": jnp.zeros((3 * hidden,), jnp.float32),
            "o_w": nrm(next(keys), (hidden, hidden)),
            "o_b": jnp.zeros((hidden,), jnp.float32),
            "ln1_g": jnp.ones((hidden,), jnp.float32),
            "ln1_b": jnp.zeros((hidden,), jnp.float32),
            "i_w": nrm(next(keys), (hidden, inter)),
            "i_b": jnp.zeros((inter,), jnp.float32),
            "out_w": nrm(next(keys), (inter, hidden)),
            "out_b": jnp.zeros((hidden,), jnp.float32),
            "ln2_g": jnp.ones((hidden,), jnp.float32),
            "ln2_b": jnp.zeros((hidden,), jnp.float32),
        }
        params["layers"].append(layer)
    return params


# ----------------------------------------------------------------------------
# model forward (plain-JAX glue around the kernels)
# ----------------------------------------------------------------------------
def similar_sentence_forward(params, input_ids, position_ids):
    """Equivalent of SimilarSentenceModel.forward(text_input, position_ids) (labels=None)."""
    cfg = params["cfg"]
    H, nH = cfg["hidden"], cfg["heads"]
    compute_dtype = params["dtype"]
    B, S = input_ids.shape

    # attention_mask = input_ids > 0 ; extended = (1 - mask) * -10000
    attn_mask = (input_ids > 0).astype(jnp.float32)
    ext_mask = ((1.0 - attn_mask) * -10000.0).reshape(B, 1, S)

    # BertEmbeddings: word + position + token_type (all zeros) -> LayerNorm (-> bf16)
    token_type_ids = jnp.zeros_like(input_ids)
    emb = (params["word_emb"][input_ids]
           + params["pos_emb"][position_ids]
           + params["tok_emb"][token_type_ids])
    x2d = layernorm(emb.reshape(B * S, H), params["emb_ln_g"], params["emb_ln_b"],
                    out_dtype=compute_dtype)

    # BertEncoder: output_all_encoded_layers=True, SimilarSentenceModel uses the last layer.
    for layer in params["layers"]:
        # fused QKV projection writing q/k/v directly (no XLA slice round-trip)
        q, k, v = qkv_linear(x2d, layer["qkv_w"], layer["qkv_b"], hidden=H)
        ctx = attention(q.reshape(B, S, H), k.reshape(B, S, H), v.reshape(B, S, H),
                        ext_mask, n_heads=nH)
        # attention output projection + residual add + LayerNorm (fused)
        x2d = linear_add_ln(ctx.reshape(B * S, H), layer["o_w"], layer["o_b"],
                            residual=x2d, gamma=layer["ln1_g"], beta=layer["ln1_b"])
        # FFN: intermediate (GELU fused), then output projection + residual + LN (fused)
        inter = linear(x2d, layer["i_w"], layer["i_b"], act="gelu")
        x2d = linear_add_ln(inter, layer["out_w"], layer["out_b"],
                            residual=x2d, gamma=layer["ln2_g"], beta=layer["ln2_b"])

    # mean/max pool over seq, concat, dense -> final_dense -> sigmoid (fused kernel)
    x = x2d.reshape(B, S, H)
    predictions = pool_head(x, params["dense_w"], params["dense_b"],
                            params["final_w"], params["final_b"])
    return predictions  # (B, 1) f32


# ----------------------------------------------------------------------------
if __name__ == "__main__":
    VOCAB, MAX_POS, TYPE_VOCAB = 100, 32, 2
    HIDDEN, HEADS, LAYERS, INTER = 32, 4, 2, 64
    B, S = 2, 8

    key = jax.random.PRNGKey(0)
    pkey, ikey = jax.random.split(key)
    params = init_params(pkey, vocab=VOCAB, max_pos=MAX_POS, type_vocab=TYPE_VOCAB,
                         hidden=HIDDEN, heads=HEADS, n_layers=LAYERS, inter=INTER)

    # deterministic inputs; include pad (0) tokens so the attention-mask path is exercised
    input_ids = jax.random.randint(ikey, (B, S), 1, VOCAB, dtype=jnp.int32)
    input_ids = input_ids.at[:, -2:].set(0)
    position_ids = jnp.broadcast_to(jnp.arange(S, dtype=jnp.int32), (B, S))

    preds = similar_sentence_forward(params, input_ids, position_ids)
    preds = jax.block_until_ready(preds)
    assert preds.shape == (B, 1)
    assert bool(jnp.all(jnp.isfinite(preds)))
    assert bool(jnp.all((preds >= 0.0) & (preds <= 1.0)))
    print("KERNEL_OK")
</pallas_src>

<mosaic_0001>
module attributes {stable_mosaic.version = 11 : i64} {
  func.func @_layernorm_kernel(%arg0: i32, %arg1: memref<16x32xf32, #tpu.memory_space<vmem>>, %arg2: memref<1x32xf32, #tpu.memory_space<vmem>>, %arg3: memref<1x32xf32, #tpu.memory_space<vmem>>, %arg4: memref<16x32xbf16, #tpu.memory_space<vmem>>) attributes {dimension_semantics = [#tpu.dimension_semantics<parallel>], iteration_bounds = array<i64: 1>, scalar_prefetch = 0 : i64, scratch_operands = 0 : i64, tpu.core_type = #tpu.core_type<tc>, window_params = [{transform_indices = @transform_0, window_bounds = array<i64: 16, 32>}, {pipeline_mode = #tpu.pipeline_mode<synchronous>, transform_indices = @transform_1, window_bounds = array<i64: 1, 32>}, {pipeline_mode = #tpu.pipeline_mode<synchronous>, transform_indices = @transform_2, window_bounds = array<i64: 1, 32>}, {transform_indices = @transform_3, window_bounds = array<i64: 16, 32>}]} {
    %c0 = arith.constant 0 : index
    %c0_0 = arith.constant 0 : index
    %0 = vector.load %arg1[%c0, %c0_0] : memref<16x32xf32, #tpu.memory_space<vmem>>, vector<16x32xf32>
    %c0_1 = arith.constant 0 : index
    %c0_2 = arith.constant 0 : index
    %1 = vector.load %arg2[%c0_1, %c0_2] : memref<1x32xf32, #tpu.memory_space<vmem>>, vector<1x32xf32>
    %c0_3 = arith.constant 0 : index
    %c0_4 = arith.constant 0 : index
    %2 = vector.load %arg3[%c0_3, %c0_4] : memref<1x32xf32, #tpu.memory_space<vmem>>, vector<1x32xf32>
    %cst = arith.constant dense<0.000000e+00> : vector<16xf32>
    %3 = vector.multi_reduction <add>, %0, %cst [1] : vector<16x32xf32> to vector<16xf32>
    %4 = vector.shape_cast %3 : vector<16xf32> to vector<16x1xf32>
    %cst_5 = arith.constant 3.200000e+01 : f32
    %5 = vector.broadcast %cst_5 : f32 to vector<16x1xf32>
    %6 = arith.divf %4, %5 : vector<16x1xf32>
    %7 = vector.broadcast %6 : vector<16x1xf32> to vector<16x32xf32>
    %8 = arith.subf %0, %7 : vector<16x32xf32>
    %9 = arith.mulf %8, %8 : vector<16x32xf32>
    %cst_6 = arith.constant dense<0.000000e+00> : vector<16xf32>
    %10 = vector.multi_reduction <add>, %9, %cst_6 [1] : vector<16x32xf32> to vector<16xf32>
    %11 = vector.shape_cast %10 : vector<16xf32> to vector<16x1xf32>
    %cst_7 = arith.constant 3.200000e+01 : f32
    %12 = vector.broadcast %cst_7 : f32 to vector<16x1xf32>
    %13 = arith.divf %11, %12 : vector<16x1xf32>
    %14 = vector.broadcast %6 : vector<16x1xf32> to vector<16x32xf32>
    %15 = arith.subf %0, %14 : vector<16x32xf32>
    %cst_8 = arith.constant 9.99999996E-13 : f32
    %16 = vector.broadcast %cst_8 : f32 to vector<16x1xf32>
    %17 = arith.addf %13, %16 : vector<16x1xf32>
    %18 = math.rsqrt %17 : vector<16x1xf32>
    %19 = vector.broadcast %18 : vector<16x1xf32> to vector<16x32xf32>
    %20 = arith.mulf %15, %19 : vector<16x32xf32>
    %21 = vector.broadcast %1 : vector<1x32xf32> to vector<16x32xf32>
    %22 = arith.mulf %20, %21 : vector<16x32xf32>
    %23 = vector.broadcast %2 : vector<1x32xf32> to vector<16x32xf32>
    %24 = arith.addf %22, %23 : vector<16x32xf32>
    %25 = arith.truncf %24 : vector<16x32xf32> to vector<16x32xbf16>
    %c0_9 = arith.constant 0 : index
    %c0_10 = arith.constant 0 : index
    %26 = vector.load %arg4[%c0_9, %c0_10] : memref<16x32xbf16, #tpu.memory_space<vmem>>, vector<16x32xbf16>
    tpu.vector_store %arg4[%c0_9, %c0_10], %25 {strides = array<i32>} : memref<16x32xbf16, #tpu.memory_space<vmem>>, vector<16x32xbf16>,
    return
  }
  func.func @transform_0(%arg0: i32) -> (i32, i32) {
    %c0_i32 = arith.constant 0 : i32
    %c0_i32_0 = arith.constant 0 : i32
    return %arg0, %c0_i32 : i32, i32
  }
  func.func @transform_1(%arg0: i32) -> (i32, i32) {
    %c0_i32 = arith.constant 0 : i32
    %c0_i32_0 = arith.constant 0 : i32
    %c0_i32_1 = arith.constant 0 : i32
    return %c0_i32, %c0_i32_0 : i32, i32
  }
  func.func @transform_2(%arg0: i32) -> (i32, i32) {
    %c0_i32 = arith.constant 0 : i32
    %c0_i32_0 = arith.constant 0 : i32
    %c0_i32_1 = arith.constant 0 : i32
    return %c0_i32, %c0_i32_0 : i32, i32
  }
  func.func @transform_3(%arg0: i32) -> (i32, i32) {
    %c0_i32 = arith.constant 0 : i32
    %c0_i32_0 = arith.constant 0 : i32
    return %arg0, %c0_i32 : i32, i32
  }
}

</mosaic_0001>

<llo_original>
// kernel: tpu_custom_call.1
$region0: #{tpu_custom_call.1}
  #allocation0 [shape = 'u32[]', space=smem, size = 0x4, offset = 0x4, fixed_abs, tag = 'smem constant byte address 0x4 - core index']
  #allocation1 [shape = 'u32[72,128]{1,0:T(1,128)}', space=vmem, size = 0x9000, scoped, tag = 'internal scratch']
  %s0 = inlined_call_operand.hbm [shape: f32[16,32], index: 0, kind: input, shape index: {}]
  %s1 = inlined_call_operand.hbm [shape: f32[1,32], index: 1, kind: input, shape index: {}]
  %s2 = inlined_call_operand.vmem [shape: f32[1,32], index: 2, kind: input, shape index: {}]
  %s3 = inlined_call_operand.hbm [shape: bf16[16,32], index: 3, kind: output, shape index: {}]
  %s4 = sld [smem:[#allocation0]]
  $region30: #{tpu_custom_call.1} parent=0
    _
  %s6 = ssub.s32 1, %s4
  %s7 = scalar_select 0, %s6, %s4
  $region1: #{tpu_custom_call.1} parent=0
    #allocation2 [shape = 'u8[8192]{0}', space=vmem, size = 0x2000, scoped, tag = 'input window, operand 0, single buffered']
    #allocation3 [shape = 's32[1]{0}', space=sflag, size = 0x4, scoped, tag = 'scoped memory for tpu_custom_call.1']
    #allocation4 [shape = 's32[1]{0}', space=sflag, size = 0x4, scoped, tag = 'scoped memory for tpu_custom_call.1']
    #allocation5 [shape = 'u8[512]{0}', space=vmem, size = 0x400, scoped, tag = 'input window, operand 1, single buffered']
    #allocation6 [shape = 's32[1]{0}', space=sflag, size = 0x4, scoped, tag = 'scoped memory for tpu_custom_call.1']
    #allocation7 [shape = 'u8[4096]{0}', space=vmem, size = 0x1000, scoped, tag = 'output window, operand 0, single buffered']
    %8 = vsyncpa [#allocation3], 0
    %9 = vsyncpa [#allocation6], 0
    %10 = vsyncpa [#allocation4], 0
    // Predicated region
    $region2: #{tpu_custom_call.1} parent=1 // pred_check
      _
    $region3: #{tpu_custom_call.1} parent=1 // pred_check_branch
      %12 = sbr.rel (0) target = $region5
    $region4: #{tpu_custom_call.1} parent=1 // pred_region
      %14 = vsyncadd [#allocation3], 0
      %s15 = sshll.u32 %s0, 4
      %s16 = int_to_ptr.hbm [resolvable:$true] %s15
      %s17 = sshll.u32 [#allocation2], 4
      %s18 = int_to_ptr.vmem [resolvable:$true] %s17
      %23 = dma.hbm_to_vmem [thread:$0]  %s16, 256, %s18, [#allocation3], 128, 128, 8
    $region5: #{tpu_custom_call.1} parent=1 // pred_fallthru
      _
    // Predicated region
    $region6: #{tpu_custom_call.1} parent=1 // pred_check
      _
    $region7: #{tpu_custom_call.1} parent=1 // pred_check_branch
      %25 = sbr.rel (0) target = $region9
    $region8: #{tpu_custom_call.1} parent=1 // pred_region
      %27 = vsyncadd [#allocation6], 0
      %s29 = sshll.u32 %s1, 4
      %s30 = int_to_ptr.hbm [resolvable:$true] %s29
      %s31 = sshll.u32 [#allocation5], 4
      %s32 = int_to_ptr.vmem [resolvable:$true] %s31
      %34 = dma.hbm_to_vmem [thread:$0]  %s30, 16, %s32, [#allocation6]
    $region9: #{tpu_custom_call.1} parent=1 // pred_fallthru
      _
    // Predicated region
    $region10: #{tpu_custom_call.1} parent=1 // pred_check
      _
    $region11: #{tpu_custom_call.1} parent=1 // pred_check_branch
      %36 = sbr.rel (0) target = $region13
    $region12: #{tpu_custom_call.1} parent=1 // pred_region
      _
    $region13: #{tpu_custom_call.1} parent=1 // pred_fallthru
      _
    // Predicated region
    $region14: #{tpu_custom_call.1} parent=1 // pred_check
      _
    $region15: #{tpu_custom_call.1} parent=1 // pred_check_branch
      %38 = sbr.rel (0) target = $region17
    $region16: #{tpu_custom_call.1} parent=1 // pred_region
      %40 = dma.done [#allocation3], 256
    $region17: #{tpu_custom_call.1} parent=1 // pred_fallthru
      _
    // Predicated region
    $region18: #{tpu_custom_call.1} parent=1 // pred_check
      _
    $region19: #{tpu_custom_call.1} parent=1 // pred_check_branch
      %42 = sbr.rel (0) target = $region21
    $region20: #{tpu_custom_call.1} parent=1 // pred_region
      %44 = dma.done [#allocation6], 16
    $region21: #{tpu_custom_call.1} parent=1 // pred_fallthru
      _
    %v45 = vld [vmem:[#allocation2] sm:$0xff]
    %v46 = vld [vmem:[#allocation2 + $0x8] sm:$0xff]
    %v47 = vld [vmem:[#allocation5] sm:$0x1]
    %v48 = vld [vmem:[%s2] sm:$0x1]
    %vm49 = vcmask 261120
    %v50 = vsel %vm49, %v45, 0.0
    %51 = vadd.xlane.f32.xlu0 %v50
    %v52 = vpop.xlane.xlu0 %51
    %v53 = vsel %vm49, %v46, 0.0
    %54 = vadd.xlane.f32.xlu0 %v53
    %v55 = vpop.xlane.xlu0 %54
    %v56 = vrcp.pop 32.0
    %v57 = vmul.f32 32.0, %v56
    %v58 = vsub.f32 1.0, %v57
    %v59 = vmul.f32 %v56, %v58
    %v60 = vadd.f32 %v56, %v59
    %vm61 = vweird.f32 %v56
    %v62 = vsel %vm61, %v56, %v60
    %v63 = vmul.f32 %v52, %v62
    %v64 = vmul.f32 %v55, %v62
    %v65 = vsub.f32 %v45, %v63
    %v66 = vsub.f32 %v46, %v64
    %v67 = vmul.f32 %v65, %v65
    %v68 = vmul.f32 %v66, %v66
    %v69 = vsel %vm49, %v67, 0.0
    %70 = vadd.xlane.f32.xlu0 %v69
    %v71 = vpop.xlane.xlu0 %70
    %v72 = vsel %vm49, %v68, 0.0
    %73 = vadd.xlane.f32.xlu0 %v72
    %v74 = vpop.xlane.xlu0 %73
    %v75 = vmul.f32 %v71, %v62
    %v76 = vmul.f32 %v74, %v62
    %v77 = vadd.f32 %v75, 1e-12
    %v78 = vadd.f32 %v76, 1e-12
    %v79 = vrsqrt.pop %v77
    %v80 = vmul.f32 %v79, %v77
    %v81 = vmul.f32 %v80, %v79
    %v82 = vmul.f32 0.5, %v81
    %v83 = vsub.f32 1.5, %v82
    %v84 = vmul.f32 %v79, %v83
    %vm85 = vweird.f32 %v77
    %vm86 = vweird.f32 %v79
    %vm87 = vmor %vm85, %vm86
    %v88 = vsel %vm87, %v79, %v84
    %v89 = vrsqrt.pop %v78
    %v90 = vmul.f32 %v89, %v78
    %v91 = vmul.f32 %v90, %v89
    %v92 = vmul.f32 0.5, %v91
    %v93 = vsub.f32 1.5, %v92
    %v94 = vmul.f32 %v89, %v93
    %vm95 = vweird.f32 %v78
    %vm96 = vweird.f32 %v89
    %vm97 = vmor %vm95, %vm96
    %v98 = vsel %vm97, %v89, %v94
    %v99 = vmul.f32 %v65, %v88
    %v100 = vmul.f32 %v66, %v98
    %v102 = vperm.slane %v47, 0
    %v104 = vmul.f32 %v99, %v102
    %v105 = vmul.f32 %v100, %v102
    %v107 = vperm.slane %v48, 0
    %v109 = vadd.f32 %v104, %v107
    %v110 = vadd.f32 %v105, %v107
    %v111 = vpack.c.bf16 %v109, %v109
    %v112 = vpack.c.bf16 %v110, %v110
    %vm113 = vcmask 257024
    %114 = vst.msk [vmem:[#allocation7] sm:$0xf] %vm113, %v111
    %115 = vst.msk [vmem:[#allocation7 + $0x4] sm:$0xf] %vm113, %v112
    // Predicated region
    $region22: #{tpu_custom_call.1} parent=1 // pred_check
      _
    $region23: #{tpu_custom_call.1} parent=1 // pred_check_branch
      %117 = sbr.rel (0) target = $region25
    $region24: #{tpu_custom_call.1} parent=1 // pred_region
      %119 = vsyncadd [#allocation4], 0
      %s120 = sshll.u32 [#allocation7], 4
      %s121 = int_to_ptr.vmem [resolvable:$true] %s120
      %s122 = sshll.u32 %s3, 4
      %s123 = int_to_ptr.hbm [resolvable:$true] %s122
      %128 = dma.vmem_to_hbm [thread:$0]  %s121, 128, %s123, [#allocation4], 64, 64, 4
    $region25: #{tpu_custom_call.1} parent=1 // pred_fallthru
      _
    // Predicated region
    $region26: #{tpu_custom_call.1} parent=1 // pred_check
      _
    $region27: #{tpu_custom_call.1} parent=1 // pred_check_branch
      %130 = sbr.rel (0) target = $region29
    $region28: #{tpu_custom_call.1} parent=1 // pred_region
      %132 = dma.done [#allocation4], 128
    $region29: #{tpu_custom_call.1} parent=1 // pred_fallthru
      _
    %133 = vsyncpa [#allocation3], 1
    %134 = vsyncpa [#allocation6], 1
    %135 = vsyncpa [#allocation4], 1

</llo_original>
